<compile_context>
chip_gen: v7x
topology: tpu7x:2x2x1
jax: 0.10.0
libtpu: 0.0.40
codegen_flags: <defaults>
</compile_context>

<pallas_src>
import math

import jax
import jax.numpy as jnp
from jax import lax
from jax.experimental import pallas as pl
from jax.experimental.pallas import tpu as pltpu

_LANE = 128
_TARGET_LANE_WIDTH = 2048          # wide lane slabs: fewer grid steps, unmasked vst bursts
_MAX_LANE_WIDTH = 4096             # don't build absurdly wide resident rows
_TARGET_TILE_BYTES = 8 * 1024 * 1024   # ~8 MiB/tile amortizes ~0.35us/step on v6e/v7x
_MIN_GRID_STEPS = 4                # keep the grid long enough to feed both v7x TCs
_SMALL_OUT_BYTES = 1 * 1024 * 1024 # below this, XLA's fused broadcast beats a pallas_call
_VMEM_LIMIT_BYTES = 32 * 1024 * 1024   # safe on v7x (64 MiB physical); tiles stay well under


def _std_broadcast_chunked_kernel(logstd_ref, std_ref):
    """logstd_ref: [1, W] f32 resident row.  std_ref: [TB, W] output tile, TB % 8 == 0.

    exp runs once per grid step on the W-wide row (EUP slot, ~free); the cast to
    the output dtype happens on that single row; the body then stores one
    (8, W) broadcast sublane-group TB/8 times, so VMEM traffic is stores only
    and vreg pressure stays at ~W/128 vregs.
    """
    row = jnp.exp(logstd_ref[...])                                   # f32 exp
    blk = jnp.broadcast_to(row, (8, row.shape[-1])).astype(std_ref.dtype)
    n_chunks = std_ref.shape[0] // 8

    def body(i, carry):
        r0 = pl.multiple_of(i * 8, 8)
        std_ref[pl.ds(r0, 8), :] = blk
        return carry

    lax.fori_loop(0, n_chunks, body, 0, unroll=min(8, n_chunks))


def _std_broadcast_simple_kernel(logstd_ref, std_ref):
    """Fallback body for tiny row counts (TB not a multiple of 8)."""
    row = jnp.exp(logstd_ref[...]).astype(std_ref.dtype)
    std_ref[...] = jnp.broadcast_to(row, std_ref.shape)


def _pick_tile_rows(rows, lane, dtype_bytes):
    """Rows per output tile: ~_TARGET_TILE_BYTES, multiple of 8, >= _MIN_GRID_STEPS tiles."""
    if rows < 8:
        return rows                       # full-dim block (tiny fallback shapes only)
    row_bytes = lane * dtype_bytes
    tb = max(8, (_TARGET_TILE_BYTES // row_bytes) // 8 * 8)
    if rows >= 8 * _MIN_GRID_STEPS:
        steps_cap = max(8, (-(-rows // _MIN_GRID_STEPS)) // 8 * 8)
        tb = min(tb, steps_cap)           # keep >= 4 grid steps for v7x's 2 TensorCores
    return min(tb, (rows // 8) * 8)


def _broadcast_std_call(logstd_row_f32, rows, lane, out_dtype):
    """Produce a [rows, lane] array where every row == exp(logstd_row_f32)."""
    dtype_bytes = jnp.dtype(out_dtype).itemsize
    tb = _pick_tile_rows(rows, lane, dtype_bytes)
    kernel = (_std_broadcast_chunked_kernel if tb % 8 == 0
              else _std_broadcast_simple_kernel)
    return pl.pallas_call(
        kernel,
        out_shape=jax.ShapeDtypeStruct((rows, lane), out_dtype),
        grid_spec=pltpu.PrefetchScalarGridSpec(
            num_scalar_prefetch=0,
            grid=(pl.cdiv(rows, tb),),
            in_specs=[pl.BlockSpec((1, lane), lambda i: (0, 0))],   # resident f32 row
            out_specs=pl.BlockSpec((tb, lane), lambda i: (i, 0)),
        ),
        compiler_params=pltpu.CompilerParams(
            dimension_semantics=("parallel",),      # megacore: split row tiles across TCs
            vmem_limit_bytes=_VMEM_LIMIT_BYTES,
        ),
    )(logstd_row_f32)


def diag_gaussian_forward(x, logstd_param):
    """x: [B, A] action means. logstd_param: [A] float AddBias parameter.

    Returns (mean, std): the parameters of FixedNormal(loc=x, scale=exp(logstd)).
    """
    B, A = x.shape
    out_dtype = x.dtype
    mean = x                                              # identity, no kernel traffic
    logstd_f32 = logstd_param.astype(jnp.float32).reshape(1, A)   # exp in f32, cast after

    out_bytes = B * A * jnp.dtype(out_dtype).itemsize
    if out_bytes < _SMALL_OUT_BYTES:
        # Tiny problem (includes the module's native B=8, A=32): a pallas_call's
        # launch + pipeline prologue dominates; use XLA's fused broadcast.
        std = jnp.broadcast_to(jnp.exp(logstd_f32).astype(out_dtype), (B, A))
        return mean, std

    N = B * A
    period = A * _LANE // math.gcd(A, _LANE)              # lcm(A, 128)
    if period <= _MAX_LANE_WIDTH and N % period == 0:
        # Lane-dense path: view std as [N/W, W] with W a wide multiple of 128 and
        # of A, so every row of the flattened view repeats the same W-wide logstd
        # pattern and every store is a full unmasked 128-lane vst. The row-major
        # reshape back to [B, A] is layout plumbing, not compute.
        W = period
        while W * 2 <= _TARGET_LANE_WIDTH and N % (W * 2) == 0:
            W *= 2
        rows = N // W
        if rows >= 8:
            logstd_row = jnp.tile(logstd_f32, (1, W // A))   # small one-off XLA op
            std = _broadcast_std_call(logstd_row, rows, W, out_dtype).reshape(B, A)
            return mean, std

    # General fallback: [B, A] output with A on the lane axis, batch-tiled.
    std = _broadcast_std_call(logstd_f32, B, A, out_dtype)
    return mean, std


if __name__ == "__main__":
    key = jax.random.PRNGKey(0)

    def reference(x, logstd):
        # Pure-JAX reference: mean == x, std == exp(zeros_like(x) + logstd row).
        ref_std = jnp.exp(jnp.zeros_like(x, dtype=jnp.float32)
                          + logstd.reshape(1, -1).astype(jnp.float32)).astype(x.dtype)
        return x, ref_std

    cases = [
        (8, 32),        # module-native tiny shape -> short-circuit path
        (16384, 32),    # lane-dense path, 128 % A == 0, W widened to 2048
        (8192, 48),     # lane-dense path via lcm(48,128)=384 pattern (A !| 128)
        (8192, 33),     # fallback path (lcm(33,128)=4224 exceeds max lane width)
    ]
    for B, A in cases:
        key, kx, kp = jax.random.split(key, 3)
        x = jax.random.normal(kx, (B, A), dtype=jnp.float32)
        logstd = 0.1 * jax.random.normal(kp, (A,), dtype=jnp.float32)

        mean, std = diag_gaussian_forward(x, logstd)
        jax.block_until_ready((mean, std))

        ref_mean, ref_std = reference(x, logstd)
        assert mean.shape == ref_mean.shape and std.shape == ref_std.shape
        assert jnp.array_equal(mean, ref_mean), f"mean mismatch at {(B, A)}"
        assert jnp.allclose(std, ref_std, rtol=1e-6, atol=1e-6), f"std mismatch at {(B, A)}"

    # Module init is zeros -> std must be exactly 1 everywhere.
    B, A = 8, 32
    x0 = jax.random.normal(jax.random.PRNGKey(0), (B, A), dtype=jnp.float32)
    mean0, std0 = diag_gaussian_forward(x0, jnp.zeros((A,), jnp.float32))
    jax.block_until_ready((mean0, std0))
    assert jnp.allclose(std0, 1.0), "zero-logstd std must be 1"

    # TODO(synk): FixedNormal sampling/log_prob are not implemented here;
    # (mean, std) fully parameterize the distribution.
    print("KERNEL_OK")
</pallas_src>

<mosaic_0001>
module attributes {stable_mosaic.version = 11 : i64} {
  func.func @_std_broadcast_chunked_kernel(%arg0: i32, %arg1: memref<1x2048xf32, #tpu.memory_space<vmem>>, %arg2: memref<64x2048xf32, #tpu.memory_space<vmem>>) attributes {dimension_semantics = [#tpu.dimension_semantics<parallel>], iteration_bounds = array<i64: 4>, scalar_prefetch = 0 : i64, scratch_operands = 0 : i64, tpu.core_type = #tpu.core_type<tc>, window_params = [{pipeline_mode = #tpu.pipeline_mode<synchronous>, transform_indices = @transform_0, window_bounds = array<i64: 1, 2048>}, {transform_indices = @transform_1, window_bounds = array<i64: 64, 2048>}]} {
    %c0 = arith.constant 0 : index
    %c0_0 = arith.constant 0 : index
    %0 = vector.load %arg1[%c0, %c0_0] : memref<1x2048xf32, #tpu.memory_space<vmem>>, vector<1x2048xf32>
    %1 = math.exp %0 : vector<1x2048xf32>
    %2 = vector.shape_cast %1 : vector<1x2048xf32> to vector<1x2048xf32>
    %3 = vector.broadcast %2 : vector<1x2048xf32> to vector<8x2048xf32>
    %c0_i32 = arith.constant 0 : i32
    %c8_i32 = arith.constant 8 : i32
    %4 = arith.muli %c0_i32, %c8_i32 : i32
    %5 = tpu.assume_multiple %4, 8 : i32
    %6 = arith.index_cast %5 : i32 to index
    %c0_1 = arith.constant 0 : index
    %7 = vector.load %arg2[%6, %c0_1] : memref<64x2048xf32, #tpu.memory_space<vmem>>, vector<8x2048xf32>
    tpu.vector_store %arg2[%6, %c0_1], %3 {strides = array<i32>} : memref<64x2048xf32, #tpu.memory_space<vmem>>, vector<8x2048xf32>,
    %c1_i32 = arith.constant 1 : i32
    %c8_i32_2 = arith.constant 8 : i32
    %8 = arith.muli %c1_i32, %c8_i32_2 : i32
    %9 = tpu.assume_multiple %8, 8 : i32
    %10 = arith.index_cast %9 : i32 to index
    %c0_3 = arith.constant 0 : index
    %11 = vector.load %arg2[%10, %c0_3] : memref<64x2048xf32, #tpu.memory_space<vmem>>, vector<8x2048xf32>
    tpu.vector_store %arg2[%10, %c0_3], %3 {strides = array<i32>} : memref<64x2048xf32, #tpu.memory_space<vmem>>, vector<8x2048xf32>,
    %c2_i32 = arith.constant 2 : i32
    %c8_i32_4 = arith.constant 8 : i32
    %12 = arith.muli %c2_i32, %c8_i32_4 : i32
    %13 = tpu.assume_multiple %12, 8 : i32
    %14 = arith.index_cast %13 : i32 to index
    %c0_5 = arith.constant 0 : index
    %15 = vector.load %arg2[%14, %c0_5] : memref<64x2048xf32, #tpu.memory_space<vmem>>, vector<8x2048xf32>
    tpu.vector_store %arg2[%14, %c0_5], %3 {strides = array<i32>} : memref<64x2048xf32, #tpu.memory_space<vmem>>, vector<8x2048xf32>,
    %c3_i32 = arith.constant 3 : i32
    %c8_i32_6 = arith.constant 8 : i32
    %16 = arith.muli %c3_i32, %c8_i32_6 : i32
    %17 = tpu.assume_multiple %16, 8 : i32
    %18 = arith.index_cast %17 : i32 to index
    %c0_7 = arith.constant 0 : index
    %19 = vector.load %arg2[%18, %c0_7] : memref<64x2048xf32, #tpu.memory_space<vmem>>, vector<8x2048xf32>
    tpu.vector_store %arg2[%18, %c0_7], %3 {strides = array<i32>} : memref<64x2048xf32, #tpu.memory_space<vmem>>, vector<8x2048xf32>,
    %c4_i32 = arith.constant 4 : i32
    %c8_i32_8 = arith.constant 8 : i32
    %20 = arith.muli %c4_i32, %c8_i32_8 : i32
    %21 = tpu.assume_multiple %20, 8 : i32
    %22 = arith.index_cast %21 : i32 to index
    %c0_9 = arith.constant 0 : index
    %23 = vector.load %arg2[%22, %c0_9] : memref<64x2048xf32, #tpu.memory_space<vmem>>, vector<8x2048xf32>
    tpu.vector_store %arg2[%22, %c0_9], %3 {strides = array<i32>} : memref<64x2048xf32, #tpu.memory_space<vmem>>, vector<8x2048xf32>,
    %c5_i32 = arith.constant 5 : i32
    %c8_i32_10 = arith.constant 8 : i32
    %24 = arith.muli %c5_i32, %c8_i32_10 : i32
    %25 = tpu.assume_multiple %24, 8 : i32
    %26 = arith.index_cast %25 : i32 to index
    %c0_11 = arith.constant 0 : index
    %27 = vector.load %arg2[%26, %c0_11] : memref<64x2048xf32, #tpu.memory_space<vmem>>, vector<8x2048xf32>
    tpu.vector_store %arg2[%26, %c0_11], %3 {strides = array<i32>} : memref<64x2048xf32, #tpu.memory_space<vmem>>, vector<8x2048xf32>,
    %c6_i32 = arith.constant 6 : i32
    %c8_i32_12 = arith.constant 8 : i32
    %28 = arith.muli %c6_i32, %c8_i32_12 : i32
    %29 = tpu.assume_multiple %28, 8 : i32
    %30 = arith.index_cast %29 : i32 to index
    %c0_13 = arith.constant 0 : index
    %31 = vector.load %arg2[%30, %c0_13] : memref<64x2048xf32, #tpu.memory_space<vmem>>, vector<8x2048xf32>
    tpu.vector_store %arg2[%30, %c0_13], %3 {strides = array<i32>} : memref<64x2048xf32, #tpu.memory_space<vmem>>, vector<8x2048xf32>,
    %c7_i32 = arith.constant 7 : i32
    %c8_i32_14 = arith.constant 8 : i32
    %32 = arith.muli %c7_i32, %c8_i32_14 : i32
    %33 = tpu.assume_multiple %32, 8 : i32
    %34 = arith.index_cast %33 : i32 to index
    %c0_15 = arith.constant 0 : index
    %35 = vector.load %arg2[%34, %c0_15] : memref<64x2048xf32, #tpu.memory_space<vmem>>, vector<8x2048xf32>
    tpu.vector_store %arg2[%34, %c0_15], %3 {strides = array<i32>} : memref<64x2048xf32, #tpu.memory_space<vmem>>, vector<8x2048xf32>,
    %c8_i32_16 = arith.constant 8 : i32
    return
  }
  func.func @transform_0(%arg0: i32) -> (i32, i32) {
    %c0_i32 = arith.constant 0 : i32
    %c0_i32_0 = arith.constant 0 : i32
    %c0_i32_1 = arith.constant 0 : i32
    return %c0_i32, %c0_i32_0 : i32, i32
  }
  func.func @transform_1(%arg0: i32) -> (i32, i32) {
    %c0_i32 = arith.constant 0 : i32
    %c0_i32_0 = arith.constant 0 : i32
    return %arg0, %c0_i32 : i32, i32
  }
}

</mosaic_0001>

<llo_original>
// kernel: tpu_custom_call.1
$region0: #{tpu_custom_call.1}
  #allocation0 [shape = 'u32[]', space=smem, size = 0x4, offset = 0x4, fixed_abs, tag = 'smem constant byte address 0x4 - core index']
  #allocation1 [shape = 'u32[144,128]{1,0:T(1,128)}', space=vmem, size = 0x12000, scoped, tag = 'internal scratch']
  %s0 = inlined_call_operand.hbm [shape: f32[1,2048], index: 0, kind: input, shape index: {}]
  %s1 = inlined_call_operand.hbm [shape: f32[256,2048], index: 1, kind: output, shape index: {}]
  %s2 = sld [smem:[#allocation0]]
  $region41: #{tpu_custom_call.1} parent=0
    _
  %s4 = ssub.s32 1, %s2
  %s5 = scalar_select 0, %s4, %s2
  $region1: #{tpu_custom_call.1} parent=0
    #allocation2 [shape = 'u8[8192]{0}', space=vmem, size = 0x2000, scoped, tag = 'input window, operand 0, single buffered']
    #allocation3 [shape = 's32[2]{0}', space=sflag, size = 0x8, scoped, tag = 'scoped memory for tpu_custom_call.1']
    #allocation4 [shape = 's32[2]{0}', space=sflag, size = 0x8, scoped, tag = 'scoped memory for tpu_custom_call.1']
    #allocation5 [shape = 'u8[1048576]{0}', space=vmem, size = 0x100000, scoped, tag = 'output window, operand 0']
    %6 = vsyncpa [#allocation3], 0
    %7 = vsyncpa [#allocation4], 0
    %s8 = scalar_lea.sflag [#allocation4], 1
    %9 = vsyncpa %s8, 0
    loop: start=0, step=1, limit=6
    $region2: #{tpu_custom_call.1} parent=1 // loop_pre_header
      _
    $region3: #{tpu_custom_call.1} parent=1 // loop_header
      %s11 = sphi 0, %s15
      %p12 = scmp.ge.s32.totalorder %s11, 6
      %s19 = sphi 0, %s19
      %s21 = sphi 0, %s19
      %s22 = sphi 0, %s21
      %s36 = sphi 0, %s22
      %s42 = sphi 0, %s44
      %s45 = sphi 0, %s42
      %s46 = sphi 0, %s45
      %s62 = sphi 0, %s46
    $region4: #{tpu_custom_call.1} parent=1 // loop_header_branch
      %14 = sbr.rel (%p12) target = $region8
    $region5: #{tpu_custom_call.1} parent=1 // loop_body
      %s16 = ssub.s32 %s11, 1
      %s17 = ssub.s32 %s11, 2
      %s18 = sadd.s32 %s11, 1
      %s20 = sadd.s32 %s19, 1
      %p23 = scmp.eq.s32.totalorder %s11, 3
      %p24 = scmp.ne.s32.totalorder %s19, %s21
      %p25 = scmp.eq.s32.totalorder %s11, 0
      %p26 = por %p24, %p25
      %p27 = scmp.ne.s32.totalorder %s19, %s21
      %p28 = scmp.eq.s32.totalorder %s16, 3
      %p29 = por %p27, %p28
      %p30 = scmp.ne.s32.totalorder %s21, %s22
      %p31 = scmp.eq.s32.totalorder %s16, 0
      %p32 = por %p30, %p31
      %p33 = scmp.ne.s32.totalorder %s21, %s22
      %p34 = scmp.eq.s32.totalorder %s17, 3
      %p35 = por %p33, %p34
      %p37 = scmp.ne.s32.totalorder %s22, %s36
      %p38 = scmp.eq.s32.totalorder %s17, 0
      %p39 = por %p37, %p38
      %s40 = ssub.s32 %s11, %s18
      %p41 = scmp.eq.s32.totalorder %s40, 0
      %s43 = sadd.s32 %s42, 1
      %s44 = scalar_select %p41, %s42, %s43
      %p47 = pneg %p41
      %p48 = scmp.eq.s32.totalorder %s11, 3
      %p49 = por %p47, %p48
      %p50 = scmp.ne.s32.totalorder %s42, %s45
      %p51 = scmp.eq.s32.totalorder %s11, 0
      %p52 = por %p50, %p51
      %p53 = scmp.ne.s32.totalorder %s42, %s45
      %p54 = scmp.eq.s32.totalorder %s16, 3
      %p55 = por %p53, %p54
      %p56 = scmp.ne.s32.totalorder %s45, %s46
      %p57 = scmp.eq.s32.totalorder %s16, 0
      %p58 = por %p56, %p57
      %p59 = scmp.ne.s32.totalorder %s45, %s46
      %p60 = scmp.eq.s32.totalorder %s17, 3
      %p61 = por %p59, %p60
      %p63 = scmp.ne.s32.totalorder %s46, %s62
      %p64 = scmp.eq.s32.totalorder %s17, 0
      %p65 = por %p63, %p64
      %p66 = scmp.le.s32.totalorder 1, %s11
      %p67 = scmp.lt.s32.totalorder %s11, 5
      %p68 = pnand %p66, %p67
      %p69 = pneg %p68
      // Predicated region
      $region9: #{tpu_custom_call.1} parent=5 // pred_check
        _
      $region10: #{tpu_custom_call.1} parent=5 // pred_check_branch
        %71 = sbr.rel (%p68) target = $region12
      $region11: #{tpu_custom_call.1} parent=5 // pred_region
        %s72 = ssub.s32 %s11, 1
        // Predicated region
        $region13: #{tpu_custom_call.1} parent=11 // pred_check
          %p73 = pneg %p32
        $region14: #{tpu_custom_call.1} parent=11 // pred_check_branch
          %75 = sbr.rel (%p73) target = $region16
        $region15: #{tpu_custom_call.1} parent=11 // pred_region
          %s77 = ssub.s32 256, 256
          %78 = vsyncadd [#allocation3], %s77
          %s80 = sshll.u32 [#allocation2], 4
          %s81 = int_to_ptr.vmem [resolvable:$true] %s80
          %83 = dma.hbm_to_vmem [thread:$0]  %s0, 256, %s81, [#allocation3]
        $region16: #{tpu_custom_call.1} parent=11 // pred_fallthru
          _
      $region12: #{tpu_custom_call.1} parent=5 // pred_fallthru
        _
      %p84 = scmp.lt.s32.totalorder %s11, 4
      // Predicated region
      $region17: #{tpu_custom_call.1} parent=5 // pred_check
        %p85 = pneg %p84
      $region18: #{tpu_custom_call.1} parent=5 // pred_check_branch
        %87 = sbr.rel (%p85) target = $region20
      $region19: #{tpu_custom_call.1} parent=5 // pred_region
        _
      $region20: #{tpu_custom_call.1} parent=5 // pred_fallthru
        _
      %p88 = scmp.le.s32.totalorder 1, %s11
      %p89 = scmp.lt.s32.totalorder %s11, 5
      %p90 = pnand %p88, %p89
      %p91 = pneg %p90
      // Predicated region
      $region21: #{tpu_custom_call.1} parent=5 // pred_check
        _
      $region22: #{tpu_custom_call.1} parent=5 // pred_check_branch
        %93 = sbr.rel (%p90) target = $region24
      $region23: #{tpu_custom_call.1} parent=5 // pred_region
        %s94 = ssub.s32 %s11, 1
        // Predicated region
        $region25: #{tpu_custom_call.1} parent=23 // pred_check
          %p95 = pneg %p32
        $region26: #{tpu_custom_call.1} parent=23 // pred_check_branch
          %97 = sbr.rel (%p95) target = $region28
        $region27: #{tpu_custom_call.1} parent=23 // pred_region
          %98 = dma.done [#allocation3], 256
        $region28: #{tpu_custom_call.1} parent=23 // pred_fallthru
          _
        %p99 = pneg %p32
        %p100 = pneg %p29
        %p101 = pneg %p58
        %p102 = pneg %p55
        %s103 = sand.u32 %s45, 1
        %s104 = scalar_lea.sflag [#allocation4], %s103
        %s105 = sand.u32 %s45, 1
        %s106 = smul.addr %s105, 1024
        %s107 = scalar_lea.vmem [#allocation5], %s106
        %s108 = smul.u32 8, %s16
        %v109 = vld [vmem:[#allocation2] sm:$0xff]
        %v110 = vld [vmem:[#allocation2 + $0x8] sm:$0xff]
        %v111 = vmul.f32 %v109, 1.442695
        %v112 = vpow.pop %v111
        %v113 = vmul.f32 %v110, 1.442695
        %v114 = vpow.pop %v113
        %v117 = vlaneseq
        %v118 = vshrl.u32 %v117, 7
        %v119 = vsub.s32 0, %v118
        %v120 = vrot.slane %v112, %v119
        %v121 = vlaneseq
        %v122 = vshrl.u32 %v121, 7
        %v123 = vsub.s32 1, %v122
        %v124 = vrot.slane %v112, %v123
        %v125 = vlaneseq
        %v126 = vshrl.u32 %v125, 7
        %v127 = vsub.s32 2, %v126
        %v128 = vrot.slane %v112, %v127
        %v129 = vlaneseq
        %v130 = vshrl.u32 %v129, 7
        %v131 = vsub.s32 3, %v130
        %v132 = vrot.slane %v112, %v131
        %v133 = vlaneseq
        %v134 = vshrl.u32 %v133, 7
        %v135 = vsub.s32 4, %v134
        %v136 = vrot.slane %v112, %v135
        %v137 = vlaneseq
        %v138 = vshrl.u32 %v137, 7
        %v139 = vsub.s32 5, %v138
        %v140 = vrot.slane %v112, %v139
        %v141 = vlaneseq
        %v142 = vshrl.u32 %v141, 7
        %v143 = vsub.s32 6, %v142
        %v144 = vrot.slane %v112, %v143
        %v145 = vlaneseq
        %v146 = vshrl.u32 %v145, 7
        %v147 = vsub.s32 7, %v146
        %v148 = vrot.slane %v112, %v147
        %v149 = vlaneseq
        %v150 = vshrl.u32 %v149, 7
        %v151 = vsub.s32 0, %v150
        %v152 = vrot.slane %v114, %v151
        %v153 = vlaneseq
        %v154 = vshrl.u32 %v153, 7
        %v155 = vsub.s32 1, %v154
        %v156 = vrot.slane %v114, %v155
        %v157 = vlaneseq
        %v158 = vshrl.u32 %v157, 7
        %v159 = vsub.s32 2, %v158
        %v160 = vrot.slane %v114, %v159
        %v161 = vlaneseq
        %v162 = vshrl.u32 %v161, 7
        %v163 = vsub.s32 3, %v162
        %v164 = vrot.slane %v114, %v163
        %v165 = vlaneseq
        %v166 = vshrl.u32 %v165, 7
        %v167 = vsub.s32 4, %v166
        %v168 = vrot.slane %v114, %v167
        %v169 = vlaneseq
        %v170 = vshrl.u32 %v169, 7
        %v171 = vsub.s32 5, %v170
        %v172 = vrot.slane %v114, %v171
        %v173 = vlaneseq
        %v174 = vshrl.u32 %v173, 7
        %v175 = vsub.s32 6, %v174
        %v176 = vrot.slane %v114, %v175
        %v177 = vlaneseq
        %v178 = vshrl.u32 %v177, 7
        %v179 = vsub.s32 7, %v178
        %v180 = vrot.slane %v114, %v179
        %s197 = smul.u32 0, 16
        %s198 = smul.addr %s197, 8
        %s199 = scalar_lea.vmem %s107, %s198 [#allocation5]
        %200 = vst [vmem:[%s199] sm:$0xff] %v120
        %201 = vst [vmem:[%s199 + $0x8] sm:$0xff] %v124
        %202 = vst [vmem:[%s199 + $0x10] sm:$0xff] %v128
        %203 = vst [vmem:[%s199 + $0x18] sm:$0xff] %v132
        %204 = vst [vmem:[%s199 + $0x20] sm:$0xff] %v136
        %205 = vst [vmem:[%s199 + $0x28] sm:$0xff] %v140
        %206 = vst [vmem:[%s199 + $0x30] sm:$0xff] %v144
        %207 = vst [vmem:[%s199 + $0x38] sm:$0xff] %v148
        %208 = vst [vmem:[%s199 + $0x40] sm:$0xff] %v152
        %209 = vst [vmem:[%s199 + $0x48] sm:$0xff] %v156
        %210 = vst [vmem:[%s199 + $0x50] sm:$0xff] %v160
        %211 = vst [vmem:[%s199 + $0x58] sm:$0xff] %v164
        %212 = vst [vmem:[%s199 + $0x60] sm:$0xff] %v168
        %213 = vst [vmem:[%s199 + $0x68] sm:$0xff] %v172
        %214 = vst [vmem:[%s199 + $0x70] sm:$0xff] %v176
        %215 = vst [vmem:[%s199 + $0x78] sm:$0xff] %v180
        %s216 = smul.u32 1, 16
        %s217 = smul.addr %s216, 8
        %s218 = scalar_lea.vmem %s107, %s217 [#allocation5]
        %219 = vst [vmem:[%s218] sm:$0xff] %v120
        %220 = vst [vmem:[%s218 + $0x8] sm:$0xff] %v124
        %221 = vst [vmem:[%s218 + $0x10] sm:$0xff] %v128
        %222 = vst [vmem:[%s218 + $0x18] sm:$0xff] %v132
        %223 = vst [vmem:[%s218 + $0x20] sm:$0xff] %v136
        %224 = vst [vmem:[%s218 + $0x28] sm:$0xff] %v140
        %225 = vst [vmem:[%s218 + $0x30] sm:$0xff] %v144
        %226 = vst [vmem:[%s218 + $0x38] sm:$0xff] %v148
        %227 = vst [vmem:[%s218 + $0x40] sm:$0xff] %v152
        %228 = vst [vmem:[%s218 + $0x48] sm:$0xff] %v156
        %229 = vst [vmem:[%s218 + $0x50] sm:$0xff] %v160
        %230 = vst [vmem:[%s218 + $0x58] sm:$0xff] %v164
        %231 = vst [vmem:[%s218 + $0x60] sm:$0xff] %v168
        %232 = vst [vmem:[%s218 + $0x68] sm:$0xff] %v172
        %233 = vst [vmem:[%s218 + $0x70] sm:$0xff] %v176
        %234 = vst [vmem:[%s218 + $0x78] sm:$0xff] %v180
        %s235 = smul.u32 2, 16
        %s236 = smul.addr %s235, 8
        %s237 = scalar_lea.vmem %s107, %s236 [#allocation5]
        %238 = vst [vmem:[%s237] sm:$0xff] %v120
        %239 = vst [vmem:[%s237 + $0x8] sm:$0xff] %v124
        %240 = vst [vmem:[%s237 + $0x10] sm:$0xff] %v128
        %241 = vst [vmem:[%s237 + $0x18] sm:$0xff] %v132
        %242 = vst [vmem:[%s237 + $0x20] sm:$0xff] %v136
        %243 = vst [vmem:[%s237 + $0x28] sm:$0xff] %v140
        %244 = vst [vmem:[%s237 + $0x30] sm:$0xff] %v144
        %245 = vst [vmem:[%s237 + $0x38] sm:$0xff] %v148
        %246 = vst [vmem:[%s237 + $0x40] sm:$0xff] %v152
        %247 = vst [vmem:[%s237 + $0x48] sm:$0xff] %v156
        %248 = vst [vmem:[%s237 + $0x50] sm:$0xff] %v160
        %249 = vst [vmem:[%s237 + $0x58] sm:$0xff] %v164
        %250 = vst [vmem:[%s237 + $0x60] sm:$0xff] %v168
        %251 = vst [vmem:[%s237 + $0x68] sm:$0xff] %v172
        %252 = vst [vmem:[%s237 + $0x70] sm:$0xff] %v176
        %253 = vst [vmem:[%s237 + $0x78] sm:$0xff] %v180
        %s254 = smul.u32 3, 16
        %s255 = smul.addr %s254, 8
        %s256 = scalar_lea.vmem %s107, %s255 [#allocation5]
        %257 = vst [vmem:[%s256] sm:$0xff] %v120
        %258 = vst [vmem:[%s256 + $0x8] sm:$0xff] %v124
        %259 = vst [vmem:[%s256 + $0x10] sm:$0xff] %v128
        %260 = vst [vmem:[%s256 + $0x18] sm:$0xff] %v132
        %261 = vst [vmem:[%s256 + $0x20] sm:$0xff] %v136
        %262 = vst [vmem:[%s256 + $0x28] sm:$0xff] %v140
        %263 = vst [vmem:[%s256 + $0x30] sm:$0xff] %v144
        %264 = vst [vmem:[%s256 + $0x38] sm:$0xff] %v148
        %265 = vst [vmem:[%s256 + $0x40] sm:$0xff] %v152
        %266 = vst [vmem:[%s256 + $0x48] sm:$0xff] %v156
        %267 = vst [vmem:[%s256 + $0x50] sm:$0xff] %v160
        %268 = vst [vmem:[%s256 + $0x58] sm:$0xff] %v164
        %269 = vst [vmem:[%s256 + $0x60] sm:$0xff] %v168
        %270 = vst [vmem:[%s256 + $0x68] sm:$0xff] %v172
        %271 = vst [vmem:[%s256 + $0x70] sm:$0xff] %v176
        %272 = vst [vmem:[%s256 + $0x78] sm:$0xff] %v180
        %s273 = smul.u32 4, 16
        %s274 = smul.addr %s273, 8
        %s275 = scalar_lea.vmem %s107, %s274 [#allocation5]
        %276 = vst [vmem:[%s275] sm:$0xff] %v120
        %277 = vst [vmem:[%s275 + $0x8] sm:$0xff] %v124
        %278 = vst [vmem:[%s275 + $0x10] sm:$0xff] %v128
        %279 = vst [vmem:[%s275 + $0x18] sm:$0xff] %v132
        %280 = vst [vmem:[%s275 + $0x20] sm:$0xff] %v136
        %281 = vst [vmem:[%s275 + $0x28] sm:$0xff] %v140
        %282 = vst [vmem:[%s275 + $0x30] sm:$0xff] %v144
        %283 = vst [vmem:[%s275 + $0x38] sm:$0xff] %v148
        %284 = vst [vmem:[%s275 + $0x40] sm:$0xff] %v152
        %285 = vst [vmem:[%s275 + $0x48] sm:$0xff] %v156
        %286 = vst [vmem:[%s275 + $0x50] sm:$0xff] %v160
        %287 = vst [vmem:[%s275 + $0x58] sm:$0xff] %v164
        %288 = vst [vmem:[%s275 + $0x60] sm:$0xff] %v168
        %289 = vst [vmem:[%s275 + $0x68] sm:$0xff] %v172
        %290 = vst [vmem:[%s275 + $0x70] sm:$0xff] %v176
        %291 = vst [vmem:[%s275 + $0x78] sm:$0xff] %v180
        %s292 = smul.u32 5, 16
        %s293 = smul.addr %s292, 8
        %s294 = scalar_lea.vmem %s107, %s293 [#allocation5]
        %295 = vst [vmem:[%s294] sm:$0xff] %v120
        %296 = vst [vmem:[%s294 + $0x8] sm:$0xff] %v124
        %297 = vst [vmem:[%s294 + $0x10] sm:$0xff] %v128
        %298 = vst [vmem:[%s294 + $0x18] sm:$0xff] %v132
        %299 = vst [vmem:[%s294 + $0x20] sm:$0xff] %v136
        %300 = vst [vmem:[%s294 + $0x28] sm:$0xff] %v140
        %301 = vst [vmem:[%s294 + $0x30] sm:$0xff] %v144
        %302 = vst [vmem:[%s294 + $0x38] sm:$0xff] %v148
        %303 = vst [vmem:[%s294 + $0x40] sm:$0xff] %v152
        %304 = vst [vmem:[%s294 + $0x48] sm:$0xff] %v156
        %305 = vst [vmem:[%s294 + $0x50] sm:$0xff] %v160
        %306 = vst [vmem:[%s294 + $0x58] sm:$0xff] %v164
        %307 = vst [vmem:[%s294 + $0x60] sm:$0xff] %v168
        %308 = vst [vmem:[%s294 + $0x68] sm:$0xff] %v172
        %309 = vst [vmem:[%s294 + $0x70] sm:$0xff] %v176
        %310 = vst [vmem:[%s294 + $0x78] sm:$0xff] %v180
        %s311 = smul.u32 6, 16
        %s312 = smul.addr %s311, 8
        %s313 = scalar_lea.vmem %s107, %s312 [#allocation5]
        %314 = vst [vmem:[%s313] sm:$0xff] %v120
        %315 = vst [vmem:[%s313 + $0x8] sm:$0xff] %v124
        %316 = vst [vmem:[%s313 + $0x10] sm:$0xff] %v128
        %317 = vst [vmem:[%s313 + $0x18] sm:$0xff] %v132
        %318 = vst [vmem:[%s313 + $0x20] sm:$0xff] %v136
        %319 = vst [vmem:[%s313 + $0x28] sm:$0xff] %v140
        %320 = vst [vmem:[%s313 + $0x30] sm:$0xff] %v144
        %321 = vst [vmem:[%s313 + $0x38] sm:$0xff] %v148
        %322 = vst [vmem:[%s313 + $0x40] sm:$0xff] %v152
        %323 = vst [vmem:[%s313 + $0x48] sm:$0xff] %v156
        %324 = vst [vmem:[%s313 + $0x50] sm:$0xff] %v160
        %325 = vst [vmem:[%s313 + $0x58] sm:$0xff] %v164
        %326 = vst [vmem:[%s313 + $0x60] sm:$0xff] %v168
        %327 = vst [vmem:[%s313 + $0x68] sm:$0xff] %v172
        %328 = vst [vmem:[%s313 + $0x70] sm:$0xff] %v176
        %329 = vst [vmem:[%s313 + $0x78] sm:$0xff] %v180
        %s330 = smul.u32 7, 16
        %s331 = smul.addr %s330, 8
        %s332 = scalar_lea.vmem %s107, %s331 [#allocation5]
        %333 = vst [vmem:[%s332] sm:$0xff] %v120
        %334 = vst [vmem:[%s332 + $0x8] sm:$0xff] %v124
        %335 = vst [vmem:[%s332 + $0x10] sm:$0xff] %v128
        %336 = vst [vmem:[%s332 + $0x18] sm:$0xff] %v132
        %337 = vst [vmem:[%s332 + $0x20] sm:$0xff] %v136
        %338 = vst [vmem:[%s332 + $0x28] sm:$0xff] %v140
        %339 = vst [vmem:[%s332 + $0x30] sm:$0xff] %v144
        %340 = vst [vmem:[%s332 + $0x38] sm:$0xff] %v148
        %341 = vst [vmem:[%s332 + $0x40] sm:$0xff] %v152
        %342 = vst [vmem:[%s332 + $0x48] sm:$0xff] %v156
        %343 = vst [vmem:[%s332 + $0x50] sm:$0xff] %v160
        %344 = vst [vmem:[%s332 + $0x58] sm:$0xff] %v164
        %345 = vst [vmem:[%s332 + $0x60] sm:$0xff] %v168
        %346 = vst [vmem:[%s332 + $0x68] sm:$0xff] %v172
        %347 = vst [vmem:[%s332 + $0x70] sm:$0xff] %v176
        %348 = vst [vmem:[%s332 + $0x78] sm:$0xff] %v180
        %s349 = sand.u32 %s45, 1
        %s350 = scalar_lea.sflag [#allocation4], %s349
        %s351 = sand.u32 %s45, 1
        %s352 = smul.addr %s351, 1024
        %s353 = scalar_lea.vmem [#allocation5], %s352
        // Predicated region
        $region29: #{tpu_custom_call.1} parent=23 // pred_check
          %p354 = pneg %p55
        $region30: #{tpu_custom_call.1} parent=23 // pred_check_branch
          %356 = sbr.rel (%p354) target = $region32
        $region31: #{tpu_custom_call.1} parent=23 // pred_region
          %s357 = smul.u32 8, %s16
          %s359 = ssub.s32 16384, 16384
          %360 = vsyncadd %s350, %s359
          %s361 = smul.addr %s357, 16
          %s362 = smul.addr %s361, 128
          %s363 = scalar_lea.hbm %s1, %s362
          %s364 = sshll.u32 %s353, 4
          %s365 = int_to_ptr.vmem [resolvable:$true] %s364
          %370 = dma.vmem_to_hbm [thread:$0]  %s365, 16384, %s363, %s350, 2048, 2048, 128
        $region32: #{tpu_custom_call.1} parent=23 // pred_fallthru
          _
      $region24: #{tpu_custom_call.1} parent=5 // pred_fallthru
        _
      %p371 = scmp.le.s32.totalorder 2, %s11
      // Predicated region
      $region33: #{tpu_custom_call.1} parent=5 // pred_check
        %p372 = pneg %p371
      $region34: #{tpu_custom_call.1} parent=5 // pred_check_branch
        %374 = sbr.rel (%p372) target = $region36
      $region35: #{tpu_custom_call.1} parent=5 // pred_region
        %s375 = ssub.s32 %s11, 2
        // Predicated region
        $region37: #{tpu_custom_call.1} parent=35 // pred_check
          %p376 = pneg %p61
        $region38: #{tpu_custom_call.1} parent=35 // pred_check_branch
          %378 = sbr.rel (%p376) target = $region40
        $region39: #{tpu_custom_call.1} parent=35 // pred_region
          %s379 = sand.u32 %s46, 1
          %s380 = scalar_lea.sflag [#allocation4], %s379
          %s381 = sand.u32 %s46, 1
          %s382 = smul.addr %s381, 1024
          %s383 = scalar_lea.vmem [#allocation5], %s382
          %384 = dma.done %s380, 16384
        $region40: #{tpu_custom_call.1} parent=35 // pred_fallthru
          _
      $region36: #{tpu_custom_call.1} parent=5 // pred_fallthru
        _
    $region6: #{tpu_custom_call.1} parent=1 // loop_footer
      %s15 = sadd.s32 1, %s11
    $region7: #{tpu_custom_call.1} parent=1 // loop_footer_branch
      %10 = sbr.rel target = $region3
    $region8: #{tpu_custom_call.1} parent=1 // loop_exit
      _
    %385 = vsyncpa [#allocation3], 1
    %s386 = scalar_lea.sflag [#allocation3], 1
    %387 = vsyncpa %s386, 1
    %388 = vsyncpa [#allocation4], 1
    %s389 = scalar_lea.sflag [#allocation4], 1
    %390 = vsyncpa %s389, 1

</llo_original>
